<compile_context>
chip_gen: v6e
topology: v6e:2x2x1
jax: 0.10.0
libtpu: 0.0.40
codegen_flags: <defaults>
</compile_context>

<pallas_src>
import jax
import jax.numpy as jnp
from jax.experimental import pallas as pl
from jax.experimental.pallas import tpu as pltpu

_SELU_ALPHA = 1.6732632423543772
_SELU_SCALE = 1.0507009873554805


def _selu(x):
    # torch.nn.SELU: scale * (max(0,x) + min(0, alpha*(exp(x)-1)))
    return _SELU_SCALE * jnp.where(x > 0, x, _SELU_ALPHA * (jnp.exp(x) - 1.0))


def _round_up(n, m):
    return ((n + m - 1) // m) * m


def _twin_mlp_kernel(obs_ref, act_ref,
                     w1o_ref, w1a_ref, b1_ref,
                     w2_ref, b2_ref,
                     w3_ref, b3_ref,
                     o1_ref, o2_ref):
    """Fused twin 3-layer SELU MLP on one batch tile (MXU matmuls, EUP exp)."""
    cdt = w1o_ref.dtype  # matmul operand dtype (f32 or bf16); accumulation is f32
    obs = obs_ref[...].astype(cdt)
    act = act_ref[...].astype(cdt)

    # Layer 1 as a split matmul: obs@W1[:od] + act@W1[od:] — avoids both the
    # HBM-level concatenate and an in-kernel minor-dim concat.
    # TODO(synk): merge into a single K=24 matmul if Mosaic minor-dim concat is cheap.
    h = (jnp.dot(obs, w1o_ref[...], preferred_element_type=jnp.float32)
         + jnp.dot(act, w1a_ref[...], preferred_element_type=jnp.float32)
         + b1_ref[...])
    h = _selu(h)

    # Layer 2: block-diagonal fused hidden (128 wide -> one MXU pass).
    h = jnp.dot(h.astype(cdt), w2_ref[...],
                preferred_element_type=jnp.float32) + b2_ref[...]
    h = _selu(h)

    # Layer 3: block-diagonal; columns [0:O) are twin-1, [O:2O) are twin-2.
    y = jnp.dot(h.astype(cdt), w3_ref[...],
                preferred_element_type=jnp.float32) + b3_ref[...]

    half = o1_ref.shape[1]
    o1_ref[...] = y[:, :half].astype(o1_ref.dtype)
    o2_ref[...] = y[:, half:].astype(o2_ref.dtype)


def init_mlp_params(key, dims):
    """Xavier-uniform weights ([in, out]) + zero biases ([1, out]), deterministic."""
    params = []
    for i in range(len(dims) - 1):
        key, sub = jax.random.split(key)
        fan_in, fan_out = dims[i], dims[i + 1]
        bound = (6.0 / (fan_in + fan_out)) ** 0.5
        w = jax.random.uniform(sub, (fan_in, fan_out), jnp.float32, -bound, bound)
        b = jnp.zeros((1, fan_out), jnp.float32)
        params += [w, b]
    return params


def pack_twin_params(params1, params2, obs_dim):
    """Pre-pack the two twin parameter sets into fused/block-diagonal weights."""
    w1a_, b1a_, w2a_, b2a_, w3a_, b3a_ = params1
    w1b_, b1b_, w2b_, b2b_, w3b_, b3b_ = params2
    H1a, H1b = w1a_.shape[1], w1b_.shape[1]
    H2a, H2b = w2a_.shape[1], w2b_.shape[1]
    Oa, Ob = w3a_.shape[1], w3b_.shape[1]
    assert Oa == Ob, "twin output widths must match (required for the twin split)"

    # layer 1: x @ [W1a | W1b], split along the input dim into obs / act parts.
    w1 = jnp.concatenate([w1a_, w1b_], axis=1)
    b1 = jnp.concatenate([b1a_, b1b_], axis=1)
    w1_obs, w1_act = w1[:obs_dim], w1[obs_dim:]

    # layer 2: block-diagonal.
    w2 = jnp.zeros((H1a + H1b, H2a + H2b), jnp.float32)
    w2 = w2.at[:H1a, :H2a].set(w2a_).at[H1a:, H2a:].set(w2b_)
    b2 = jnp.concatenate([b2a_, b2b_], axis=1)

    # layer 3: block-diagonal, NO lane padding (out width = Oa + Ob).
    out_fused = Oa + Ob
    w3 = jnp.zeros((H2a + H2b, out_fused), jnp.float32)
    w3 = w3.at[:H2a, :Oa].set(w3a_).at[H2a:, Oa:].set(w3b_)
    b3 = jnp.concatenate([b3a_, b3b_], axis=1)

    return (w1_obs, w1_act, b1, w2, b2, w3, b3), out_fused


def twinned_multihead_sf_forward(obs, act, fused_params, out_fused,
                                 n_heads, feature_dim, tb=1024,
                                 compute_dtype=jnp.float32):
    """Forward of TwinnedMultiheadSFNetwork. Returns (sf1, sf2) of shape [B,H,F]."""
    w1_obs, w1_act, b1, w2, b2, w3, b3 = fused_params
    B, obs_dim = obs.shape
    act_dim = act.shape[1]
    half = out_fused // 2

    # MXU operands in compute_dtype (bf16 = single-pass MXU, half weight VMEM);
    # biases stay f32 so bias-add + SELU run in f32 (mandatory on v5e).
    w1_obs = w1_obs.astype(compute_dtype)
    w1_act = w1_act.astype(compute_dtype)
    w2 = w2.astype(compute_dtype)
    w3 = w3.astype(compute_dtype)

    # --- batch tiling: big tiles, no XLA pad/slice, ragged tail masked by Pallas ---
    tb = max(8, min(tb, _round_up(B, 8)))
    tb = (tb // 8) * 8
    if tb >= B:
        tb = B              # single tile: block dim == full array dim (always legal)
        num_tiles = 1
    else:
        num_tiles = pl.cdiv(B, tb)   # last tile may be ragged -> edge-masked
    if num_tiles == 1 and B >= 16:
        # v7x megacore: make the "parallel" batch axis actually shard over 2 TCs.
        tb2 = _round_up(pl.cdiv(B, 2), 8)
        if tb2 < B:
            tb = tb2
            num_tiles = pl.cdiv(B, tb)

    grid_spec = pltpu.PrefetchScalarGridSpec(
        num_scalar_prefetch=0,
        grid=(num_tiles,),
        in_specs=[
            pl.BlockSpec((tb, obs_dim), lambda i: (i, 0)),   # obs tile
            pl.BlockSpec((tb, act_dim), lambda i: (i, 0)),   # act tile
            pl.BlockSpec(w1_obs.shape, lambda i: (0, 0)),    # weights: VMEM-resident
            pl.BlockSpec(w1_act.shape, lambda i: (0, 0)),
            pl.BlockSpec(b1.shape, lambda i: (0, 0)),
            pl.BlockSpec(w2.shape, lambda i: (0, 0)),
            pl.BlockSpec(b2.shape, lambda i: (0, 0)),
            pl.BlockSpec(w3.shape, lambda i: (0, 0)),
            pl.BlockSpec(b3.shape, lambda i: (0, 0)),
        ],
        out_specs=[
            pl.BlockSpec((tb, half), lambda i: (i, 0)),      # twin 1
            pl.BlockSpec((tb, half), lambda i: (i, 0)),      # twin 2
        ],
    )

    # TODO(synk): sweep pipeline_mode=pl.Buffered(3) on obs/act/out specs.
    y1, y2 = pl.pallas_call(
        _twin_mlp_kernel,
        out_shape=(jax.ShapeDtypeStruct((B, half), jnp.float32),
                   jax.ShapeDtypeStruct((B, half), jnp.float32)),
        grid_spec=grid_spec,
        compiler_params=pltpu.CompilerParams(
            dimension_semantics=("parallel",),
            # headroom for large tb (esp. v5e's 16 MiB scoped default); actual
            # usage at tb=2048 is only ~5 MiB.
            vmem_limit_bytes=48 * 1024 * 1024),
    )(obs, act, w1_obs, w1_act, b1, w2, b2, w3, b3)

    sf1 = y1.reshape(B, n_heads, feature_dim)
    sf2 = y2.reshape(B, n_heads, feature_dim)
    return sf1, sf2


def _ref_mlp(x, params):
    w1, b1, w2, b2, w3, b3 = params
    h = _selu(x @ w1 + b1)
    h = _selu(h @ w2 + b2)
    return h @ w3 + b3


if __name__ == "__main__":
    observation_dim, action_dim = 16, 8
    feature_dim, n_heads = 8, 4
    sizes = [64, 64]

    key = jax.random.PRNGKey(0)
    _, _, k_p1, k_p2 = jax.random.split(key, 4)

    dims = [observation_dim + action_dim] + sizes + [feature_dim * n_heads]
    params1 = init_mlp_params(k_p1, dims)
    params2 = init_mlp_params(k_p2, dims)
    fused_params, out_fused = pack_twin_params(params1, params2, observation_dim)

    # (batch, tb, matmul dtype, rtol, atol):
    #   * B=8   : single exact tile, f32 MXU, tight tolerance
    #   * B=20  : forced 2-tile grid with a ragged (masked) tail, bf16 MXU
    #   * B=256 : multi-tile evenly-divisible grid, f32 MXU, tight tolerance
    cases = [
        (8, 1024, jnp.float32, 1e-5, 1e-5),
        (20, 1024, jnp.bfloat16, 5e-2, 5e-2),
        (256, 128, jnp.float32, 1e-5, 1e-5),
    ]
    for batch, tb, cdt, rtol, atol in cases:
        kb = jax.random.fold_in(key, batch)
        k_obs, k_act = jax.random.split(kb)
        obs = jax.random.normal(k_obs, (batch, observation_dim), jnp.float32)
        act = jax.random.normal(k_act, (batch, action_dim), jnp.float32)

        sf1, sf2 = twinned_multihead_sf_forward(
            obs, act, fused_params, out_fused, n_heads, feature_dim,
            tb=tb, compute_dtype=cdt)
        jax.block_until_ready((sf1, sf2))

        # correctness check against a pure-JAX f32 reference of the same math
        x = jnp.concatenate([obs, act], axis=1)
        ref1 = _ref_mlp(x, params1).reshape(-1, n_heads, feature_dim)
        ref2 = _ref_mlp(x, params2).reshape(-1, n_heads, feature_dim)
        assert sf1.shape == (batch, n_heads, feature_dim)
        assert sf2.shape == (batch, n_heads, feature_dim)
        assert jnp.allclose(sf1, ref1, rtol=rtol, atol=atol), f"sf1 mismatch B={batch}"
        assert jnp.allclose(sf2, ref2, rtol=rtol, atol=atol), f"sf2 mismatch B={batch}"

    print("KERNEL_OK")
</pallas_src>

<mosaic_0001>
module attributes {stable_mosaic.version = 11 : i64} {
  func.func @_twin_mlp_kernel(%arg0: i32, %arg1: memref<8x16xf32, #tpu.memory_space<vmem>>, %arg2: memref<8x8xf32, #tpu.memory_space<vmem>>, %arg3: memref<16x128xf32, #tpu.memory_space<vmem>>, %arg4: memref<8x128xf32, #tpu.memory_space<vmem>>, %arg5: memref<1x128xf32, #tpu.memory_space<vmem>>, %arg6: memref<128x128xf32, #tpu.memory_space<vmem>>, %arg7: memref<1x128xf32, #tpu.memory_space<vmem>>, %arg8: memref<128x64xf32, #tpu.memory_space<vmem>>, %arg9: memref<1x64xf32, #tpu.memory_space<vmem>>, %arg10: memref<8x32xf32, #tpu.memory_space<vmem>>, %arg11: memref<8x32xf32, #tpu.memory_space<vmem>>) attributes {dimension_semantics = [#tpu.dimension_semantics<parallel>], iteration_bounds = array<i64: 1>, scalar_prefetch = 0 : i64, scratch_operands = 0 : i64, tpu.core_type = #tpu.core_type<tc>, window_params = [{transform_indices = @transform_0, window_bounds = array<i64: 8, 16>}, {transform_indices = @transform_1, window_bounds = array<i64: 8, 8>}, {pipeline_mode = #tpu.pipeline_mode<synchronous>, transform_indices = @transform_2, window_bounds = array<i64: 16, 128>}, {pipeline_mode = #tpu.pipeline_mode<synchronous>, transform_indices = @transform_3, window_bounds = array<i64: 8, 128>}, {pipeline_mode = #tpu.pipeline_mode<synchronous>, transform_indices = @transform_4, window_bounds = array<i64: 1, 128>}, {pipeline_mode = #tpu.pipeline_mode<synchronous>, transform_indices = @transform_5, window_bounds = array<i64: 128, 128>}, {pipeline_mode = #tpu.pipeline_mode<synchronous>, transform_indices = @transform_6, window_bounds = array<i64: 1, 128>}, {pipeline_mode = #tpu.pipeline_mode<synchronous>, transform_indices = @transform_7, window_bounds = array<i64: 128, 64>}, {pipeline_mode = #tpu.pipeline_mode<synchronous>, transform_indices = @transform_8, window_bounds = array<i64: 1, 64>}, {transform_indices = @transform_9, window_bounds = array<i64: 8, 32>}, {transform_indices = @transform_10, window_bounds = array<i64: 8, 32>}]} {
    %c0 = arith.constant 0 : index
    %c0_0 = arith.constant 0 : index
    %0 = vector.load %arg1[%c0, %c0_0] : memref<8x16xf32, #tpu.memory_space<vmem>>, vector<8x16xf32>
    %c0_1 = arith.constant 0 : index
    %c0_2 = arith.constant 0 : index
    %1 = vector.load %arg2[%c0_1, %c0_2] : memref<8x8xf32, #tpu.memory_space<vmem>>, vector<8x8xf32>
    %c0_3 = arith.constant 0 : index
    %c0_4 = arith.constant 0 : index
    %2 = vector.load %arg3[%c0_3, %c0_4] : memref<16x128xf32, #tpu.memory_space<vmem>>, vector<16x128xf32>
    %cst = arith.constant dense<0.000000e+00> : vector<8x128xf32>
    %3 = tpu.matmul %0, %2, %cst {dimension_numbers = #tpu.dot_dimension_numbers<[1], [0], [0], [1], [0, 0, 1, 1], [], []>} : vector<8x16xf32>, vector<16x128xf32>, vector<8x128xf32> -> vector<8x128xf32>
    %c0_5 = arith.constant 0 : index
    %c0_6 = arith.constant 0 : index
    %4 = vector.load %arg4[%c0_5, %c0_6] : memref<8x128xf32, #tpu.memory_space<vmem>>, vector<8x128xf32>
    %cst_7 = arith.constant dense<0.000000e+00> : vector<8x128xf32>
    %5 = tpu.matmul %1, %4, %cst_7 {dimension_numbers = #tpu.dot_dimension_numbers<[1], [0], [0], [1], [0, 0, 1, 1], [], []>} : vector<8x8xf32>, vector<8x128xf32>, vector<8x128xf32> -> vector<8x128xf32>
    %6 = arith.addf %3, %5 : vector<8x128xf32>
    %c0_8 = arith.constant 0 : index
    %c0_9 = arith.constant 0 : index
    %7 = vector.load %arg5[%c0_8, %c0_9] : memref<1x128xf32, #tpu.memory_space<vmem>>, vector<1x128xf32>
    %8 = vector.broadcast %7 : vector<1x128xf32> to vector<8x128xf32>
    %9 = arith.addf %6, %8 : vector<8x128xf32>
    %cst_10 = arith.constant 0.000000e+00 : f32
    %10 = vector.broadcast %cst_10 : f32 to vector<8x128xf32>
    %11 = arith.cmpf ogt, %9, %10 : vector<8x128xf32>
    %12 = math.exp %9 : vector<8x128xf32>
    %cst_11 = arith.constant 1.000000e+00 : f32
    %13 = vector.broadcast %cst_11 : f32 to vector<8x128xf32>
    %14 = arith.subf %12, %13 : vector<8x128xf32>
    %cst_12 = arith.constant 1.67326319 : f32
    %15 = vector.broadcast %cst_12 : f32 to vector<8x128xf32>
    %16 = arith.mulf %15, %14 : vector<8x128xf32>
    %17 = arith.select %11, %9, %16 : vector<8x128xi1>, vector<8x128xf32>
    %cst_13 = arith.constant 1.05070102 : f32
    %18 = vector.broadcast %cst_13 : f32 to vector<8x128xf32>
    %19 = arith.mulf %18, %17 : vector<8x128xf32>
    %c0_14 = arith.constant 0 : index
    %c0_15 = arith.constant 0 : index
    %20 = vector.load %arg6[%c0_14, %c0_15] : memref<128x128xf32, #tpu.memory_space<vmem>>, vector<128x128xf32>
    %cst_16 = arith.constant dense<0.000000e+00> : vector<8x128xf32>
    %21 = tpu.matmul %19, %20, %cst_16 {dimension_numbers = #tpu.dot_dimension_numbers<[1], [0], [0], [1], [0, 0, 1, 1], [], []>} : vector<8x128xf32>, vector<128x128xf32>, vector<8x128xf32> -> vector<8x128xf32>
    %c0_17 = arith.constant 0 : index
    %c0_18 = arith.constant 0 : index
    %22 = vector.load %arg7[%c0_17, %c0_18] : memref<1x128xf32, #tpu.memory_space<vmem>>, vector<1x128xf32>
    %23 = vector.broadcast %22 : vector<1x128xf32> to vector<8x128xf32>
    %24 = arith.addf %21, %23 : vector<8x128xf32>
    %cst_19 = arith.constant 0.000000e+00 : f32
    %25 = vector.broadcast %cst_19 : f32 to vector<8x128xf32>
    %26 = arith.cmpf ogt, %24, %25 : vector<8x128xf32>
    %27 = math.exp %24 : vector<8x128xf32>
    %cst_20 = arith.constant 1.000000e+00 : f32
    %28 = vector.broadcast %cst_20 : f32 to vector<8x128xf32>
    %29 = arith.subf %27, %28 : vector<8x128xf32>
    %cst_21 = arith.constant 1.67326319 : f32
    %30 = vector.broadcast %cst_21 : f32 to vector<8x128xf32>
    %31 = arith.mulf %30, %29 : vector<8x128xf32>
    %32 = arith.select %26, %24, %31 : vector<8x128xi1>, vector<8x128xf32>
    %cst_22 = arith.constant 1.05070102 : f32
    %33 = vector.broadcast %cst_22 : f32 to vector<8x128xf32>
    %34 = arith.mulf %33, %32 : vector<8x128xf32>
    %c0_23 = arith.constant 0 : index
    %c0_24 = arith.constant 0 : index
    %35 = vector.load %arg8[%c0_23, %c0_24] : memref<128x64xf32, #tpu.memory_space<vmem>>, vector<128x64xf32>
    %cst_25 = arith.constant dense<0.000000e+00> : vector<8x64xf32>
    %36 = tpu.matmul %34, %35, %cst_25 {dimension_numbers = #tpu.dot_dimension_numbers<[1], [0], [0], [1], [0, 0, 1, 1], [], []>} : vector<8x128xf32>, vector<128x64xf32>, vector<8x64xf32> -> vector<8x64xf32>
    %c0_26 = arith.constant 0 : index
    %c0_27 = arith.constant 0 : index
    %37 = vector.load %arg9[%c0_26, %c0_27] : memref<1x64xf32, #tpu.memory_space<vmem>>, vector<1x64xf32>
    %38 = vector.broadcast %37 : vector<1x64xf32> to vector<8x64xf32>
    %39 = arith.addf %36, %38 : vector<8x64xf32>
    %40 = vector.extract_strided_slice %39 {offsets = [0, 0], sizes = [8, 32], strides = [1, 1]} : vector<8x64xf32> to vector<8x32xf32>
    %c0_28 = arith.constant 0 : index
    %c0_29 = arith.constant 0 : index
    %41 = vector.load %arg10[%c0_28, %c0_29] : memref<8x32xf32, #tpu.memory_space<vmem>>, vector<8x32xf32>
    tpu.vector_store %arg10[%c0_28, %c0_29], %40 {strides = array<i32>} : memref<8x32xf32, #tpu.memory_space<vmem>>, vector<8x32xf32>,
    %42 = vector.extract_strided_slice %39 {offsets = [0, 32], sizes = [8, 32], strides = [1, 1]} : vector<8x64xf32> to vector<8x32xf32>
    %c0_30 = arith.constant 0 : index
    %c0_31 = arith.constant 0 : index
    %43 = vector.load %arg11[%c0_30, %c0_31] : memref<8x32xf32, #tpu.memory_space<vmem>>, vector<8x32xf32>
    tpu.vector_store %arg11[%c0_30, %c0_31], %42 {strides = array<i32>} : memref<8x32xf32, #tpu.memory_space<vmem>>, vector<8x32xf32>,
    return
  }
  func.func @transform_0(%arg0: i32) -> (i32, i32) {
    %c0_i32 = arith.constant 0 : i32
    %c0_i32_0 = arith.constant 0 : i32
    return %arg0, %c0_i32 : i32, i32
  }
  func.func @transform_1(%arg0: i32) -> (i32, i32) {
    %c0_i32 = arith.constant 0 : i32
    %c0_i32_0 = arith.constant 0 : i32
    return %arg0, %c0_i32 : i32, i32
  }
  func.func @transform_2(%arg0: i32) -> (i32, i32) {
    %c0_i32 = arith.constant 0 : i32
    %c0_i32_0 = arith.constant 0 : i32
    %c0_i32_1 = arith.constant 0 : i32
    return %c0_i32, %c0_i32_0 : i32, i32
  }
  func.func @transform_3(%arg0: i32) -> (i32, i32) {
    %c0_i32 = arith.constant 0 : i32
    %c0_i32_0 = arith.constant 0 : i32
    %c0_i32_1 = arith.constant 0 : i32
    return %c0_i32, %c0_i32_0 : i32, i32
  }
  func.func @transform_4(%arg0: i32) -> (i32, i32) {
    %c0_i32 = arith.constant 0 : i32
    %c0_i32_0 = arith.constant 0 : i32
    %c0_i32_1 = arith.constant 0 : i32
    return %c0_i32, %c0_i32_0 : i32, i32
  }
  func.func @transform_5(%arg0: i32) -> (i32, i32) {
    %c0_i32 = arith.constant 0 : i32
    %c0_i32_0 = arith.constant 0 : i32
    %c0_i32_1 = arith.constant 0 : i32
    return %c0_i32, %c0_i32_0 : i32, i32
  }
  func.func @transform_6(%arg0: i32) -> (i32, i32) {
    %c0_i32 = arith.constant 0 : i32
    %c0_i32_0 = arith.constant 0 : i32
    %c0_i32_1 = arith.constant 0 : i32
    return %c0_i32, %c0_i32_0 : i32, i32
  }
  func.func @transform_7(%arg0: i32) -> (i32, i32) {
    %c0_i32 = arith.constant 0 : i32
    %c0_i32_0 = arith.constant 0 : i32
    %c0_i32_1 = arith.constant 0 : i32
    return %c0_i32, %c0_i32_0 : i32, i32
  }
  func.func @transform_8(%arg0: i32) -> (i32, i32) {
    %c0_i32 = arith.constant 0 : i32
    %c0_i32_0 = arith.constant 0 : i32
    %c0_i32_1 = arith.constant 0 : i32
    return %c0_i32, %c0_i32_0 : i32, i32
  }
  func.func @transform_9(%arg0: i32) -> (i32, i32) {
    %c0_i32 = arith.constant 0 : i32
    %c0_i32_0 = arith.constant 0 : i32
    return %arg0, %c0_i32 : i32, i32
  }
  func.func @transform_10(%arg0: i32) -> (i32, i32) {
    %c0_i32 = arith.constant 0 : i32
    %c0_i32_0 = arith.constant 0 : i32
    return %arg0, %c0_i32 : i32, i32
  }
}

</mosaic_0001>

<llo_original>
// kernel: tpu_custom_call.1
$region0: #{tpu_custom_call.1}
  #allocation0 [shape = 'u32[]', space=smem, size = 0x4, offset = 0x4, fixed_abs, tag = 'smem constant byte address 0x4 - core index']
  #allocation1 [shape = 'u32[144,128]{1,0:T(1,128)}', space=vmem, size = 0x12000, scoped, tag = 'internal scratch']
  %s0 = inlined_call_operand.vmem [shape: f32[8,16], index: 0, kind: input, shape index: {}]
  %s1 = inlined_call_operand.vmem [shape: f32[8,8], index: 1, kind: input, shape index: {}]
  %s2 = inlined_call_operand.vmem [shape: f32[16,128], index: 2, kind: input, shape index: {}]
  %s3 = inlined_call_operand.vmem [shape: f32[8,128], index: 3, kind: input, shape index: {}]
  %s4 = inlined_call_operand.vmem [shape: f32[1,128], index: 4, kind: input, shape index: {}]
  %s5 = inlined_call_operand.vmem [shape: f32[128,128], index: 5, kind: input, shape index: {}]
  %s6 = inlined_call_operand.vmem [shape: f32[1,128], index: 6, kind: input, shape index: {}]
  %s7 = inlined_call_operand.vmem [shape: f32[128,64], index: 7, kind: input, shape index: {}]
  %s8 = inlined_call_operand.vmem [shape: f32[1,64], index: 8, kind: input, shape index: {}]
  %s9 = inlined_call_operand.hbm [shape: f32[8,32], index: 9, kind: output, shape index: {0}]
  %s10 = inlined_call_operand.hbm [shape: f32[8,32], index: 10, kind: output, shape index: {1}]
  %11 = xla_tuple %s9, %s10
  %s12 = sld [smem:[#allocation0]]
  $region54: #{tpu_custom_call.1} parent=0
    _
  %s14 = ssub.s32 1, %s12
  %s15 = scalar_select 0, %s14, %s12
  $region1: #{tpu_custom_call.1} parent=0
    #allocation2 [shape = 'u8[4096]{0}', space=vmem, size = 0x1000, scoped, tag = 'output window, operand 0, single buffered']
    #allocation3 [shape = 's32[1]{0}', space=sflag, size = 0x4, scoped, tag = 'scoped memory for tpu_custom_call.1']
    #allocation4 [shape = 'u8[4096]{0}', space=vmem, size = 0x1000, scoped, tag = 'output window, operand 1, single buffered']
    #allocation5 [shape = 's32[1]{0}', space=sflag, size = 0x4, scoped, tag = 'scoped memory for tpu_custom_call.1']
    %16 = vsyncpa [#allocation3], 0
    %17 = vsyncpa [#allocation5], 0
    // Predicated region
    $region2: #{tpu_custom_call.1} parent=1 // pred_check
      _
    $region3: #{tpu_custom_call.1} parent=1 // pred_check_branch
      %19 = sbr.rel (0) target = $region5
    $region4: #{tpu_custom_call.1} parent=1 // pred_region
      _
    $region5: #{tpu_custom_call.1} parent=1 // pred_fallthru
      _
    // Predicated region
    $region6: #{tpu_custom_call.1} parent=1 // pred_check
      _
    $region7: #{tpu_custom_call.1} parent=1 // pred_check_branch
      %21 = sbr.rel (0) target = $region9
    $region8: #{tpu_custom_call.1} parent=1 // pred_region
      _
    $region9: #{tpu_custom_call.1} parent=1 // pred_fallthru
      _
    // Predicated region
    $region10: #{tpu_custom_call.1} parent=1 // pred_check
      _
    $region11: #{tpu_custom_call.1} parent=1 // pred_check_branch
      %23 = sbr.rel (0) target = $region13
    $region12: #{tpu_custom_call.1} parent=1 // pred_region
      _
    $region13: #{tpu_custom_call.1} parent=1 // pred_fallthru
      _
    // Predicated region
    $region14: #{tpu_custom_call.1} parent=1 // pred_check
      _
    $region15: #{tpu_custom_call.1} parent=1 // pred_check_branch
      %25 = sbr.rel (0) target = $region17
    $region16: #{tpu_custom_call.1} parent=1 // pred_region
      _
    $region17: #{tpu_custom_call.1} parent=1 // pred_fallthru
      _
    // Predicated region
    $region18: #{tpu_custom_call.1} parent=1 // pred_check
      _
    $region19: #{tpu_custom_call.1} parent=1 // pred_check_branch
      %27 = sbr.rel (0) target = $region21
    $region20: #{tpu_custom_call.1} parent=1 // pred_region
      _
    $region21: #{tpu_custom_call.1} parent=1 // pred_fallthru
      _
    // Predicated region
    $region22: #{tpu_custom_call.1} parent=1 // pred_check
      _
    $region23: #{tpu_custom_call.1} parent=1 // pred_check_branch
      %29 = sbr.rel (0) target = $region25
    $region24: #{tpu_custom_call.1} parent=1 // pred_region
      _
    $region25: #{tpu_custom_call.1} parent=1 // pred_fallthru
      _
    // Predicated region
    $region26: #{tpu_custom_call.1} parent=1 // pred_check
      _
    $region27: #{tpu_custom_call.1} parent=1 // pred_check_branch
      %31 = sbr.rel (0) target = $region29
    $region28: #{tpu_custom_call.1} parent=1 // pred_region
      _
    $region29: #{tpu_custom_call.1} parent=1 // pred_fallthru
      _
    // Predicated region
    $region30: #{tpu_custom_call.1} parent=1 // pred_check
      _
    $region31: #{tpu_custom_call.1} parent=1 // pred_check_branch
      %33 = sbr.rel (0) target = $region33
    $region32: #{tpu_custom_call.1} parent=1 // pred_region
      _
    $region33: #{tpu_custom_call.1} parent=1 // pred_fallthru
      _
    // Predicated region
    $region34: #{tpu_custom_call.1} parent=1 // pred_check
      _
    $region35: #{tpu_custom_call.1} parent=1 // pred_check_branch
      %35 = sbr.rel (0) target = $region37
    $region36: #{tpu_custom_call.1} parent=1 // pred_region
      _
    $region37: #{tpu_custom_call.1} parent=1 // pred_fallthru
      _
    %v36 = vld [vmem:[%s0] sm:$0xff]
    %v37 = vld [vmem:[%s1] sm:$0xff]
    %v38 = vld [vmem:[%s2] sm:$0xff]
    %v39 = vld [vmem:[%s2 + $0x8] sm:$0xff]
    %v40 = vld [vmem:[%s3] sm:$0xff]
    %vm41 = vcmask 64512
    %v43 = vsel %vm41, %v37, 0
    %45 = vmatprep.subr.mxu0 0.0
    %46 = vmatpush1.msra.mxu0 0.0
    %47 = vmatprep.subr.mxu0 0.0
    %48 = vmatpush1.msra.mxu0 0.0
    %49 = vmatprep.subr.mxu0 0.0
    %50 = vmatpush1.msra.mxu0 0.0
    %51 = vmatprep.subr.mxu0 0.0
    %52 = vmatpush1.msra.mxu0 0.0
    %53 = vmatprep.subr.mxu0 0.0
    %54 = vmatpush1.msra.mxu0 0.0
    %55 = vmatprep.subr.mxu0 0.0
    %56 = vmatpush1.msra.mxu0 0.0
    %57 = vmatprep.subr.mxu0 0.0
    %58 = vmatpush1.msra.mxu0 0.0
    %59 = vmatprep.subr.mxu0 0.0
    %60 = vmatpush1.msra.mxu0 0.0
    %61 = vmatprep.subr.mxu0 0.0
    %62 = vmatpush1.msra.mxu0 0.0
    %63 = vmatprep.subr.mxu0 0.0
    %64 = vmatpush1.msra.mxu0 0.0
    %65 = vmatprep.subr.mxu0 0.0
    %66 = vmatpush1.msra.mxu0 0.0
    %67 = vmatprep.subr.mxu0 0.0
    %68 = vmatpush1.msra.mxu0 0.0
    %69 = vmatprep.subr.mxu0 0.0
    %70 = vmatpush1.msra.mxu0 0.0
    %71 = vmatprep.subr.mxu0 0.0
    %72 = vmatpush1.msra.mxu0 0.0
    %73 = vmatprep.subr.mxu0 0.0
    %74 = vmatpush1.msra.mxu0 0.0
    %75 = vmatprep.subr.mxu0 0.0
    %76 = vmatpush1.msra.mxu0 %v40
    %77 = vmatprep.subr.mxu0 0.0
    %78 = vmatpush2.msra.mxu0 0.0
    %79 = vmatprep.subr.mxu0 0.0
    %80 = vmatpush2.msra.mxu0 0.0
    %81 = vmatprep.subr.mxu0 0.0
    %82 = vmatpush2.msra.mxu0 0.0
    %83 = vmatprep.subr.mxu0 0.0
    %84 = vmatpush2.msra.mxu0 0.0
    %85 = vmatprep.subr.mxu0 0.0
    %86 = vmatpush2.msra.mxu0 0.0
    %87 = vmatprep.subr.mxu0 0.0
    %88 = vmatpush2.msra.mxu0 0.0
    %89 = vmatprep.subr.mxu0 0.0
    %90 = vmatpush2.msra.mxu0 0.0
    %91 = vmatprep.subr.mxu0 0.0
    %92 = vmatpush2.msra.mxu0 0.0
    %93 = vmatprep.subr.mxu0 0.0
    %94 = vmatpush2.msra.mxu0 0.0
    %95 = vmatprep.subr.mxu0 0.0
    %96 = vmatpush2.msra.mxu0 0.0
    %97 = vmatprep.subr.mxu0 0.0
    %98 = vmatpush2.msra.mxu0 0.0
    %99 = vmatprep.subr.mxu0 0.0
    %100 = vmatpush2.msra.mxu0 0.0
    %101 = vmatprep.subr.mxu0 0.0
    %102 = vmatpush2.msra.mxu0 0.0
    %103 = vmatprep.subr.mxu0 0.0
    %104 = vmatpush2.msra.mxu0 0.0
    %105 = vmatprep.subr.mxu0 0.0
    %106 = vmatpush2.msra.mxu0 0.0
    %107 = vmatprep.subr.mxu0 0.0
    %108 = vmatpush2.msra.mxu0 0.0
    %109 = vmatprep.mubr.f32.mxu0 0.0
    %110 = vmatmul.mubr.f32.gmra.mxu0 %v43
    %v111 = vpop.f32.mrf.mxu0
    %v112 = vadd.f32 0.0, %v111
    %v113 = vpop.f32.mrf.mxu0
    %114 = vdwg.mxu0
    %vm115 = vcmask 130048
    %v117 = vsel %vm115, %v36, 0
    %119 = vmatprep.subr.mxu0 0.0
    %120 = vmatpush1.msra.mxu0 0.0
    %121 = vmatprep.subr.mxu0 0.0
    %122 = vmatpush1.msra.mxu0 0.0
    %123 = vmatprep.subr.mxu0 0.0
    %124 = vmatpush1.msra.mxu0 0.0
    %125 = vmatprep.subr.mxu0 0.0
    %126 = vmatpush1.msra.mxu0 0.0
    %127 = vmatprep.subr.mxu0 0.0
    %128 = vmatpush1.msra.mxu0 0.0
    %129 = vmatprep.subr.mxu0 0.0
    %130 = vmatpush1.msra.mxu0 0.0
    %131 = vmatprep.subr.mxu0 0.0
    %132 = vmatpush1.msra.mxu0 0.0
    %133 = vmatprep.subr.mxu0 0.0
    %134 = vmatpush1.msra.mxu0 0.0
    %135 = vmatprep.subr.mxu0 0.0
    %136 = vmatpush1.msra.mxu0 0.0
    %137 = vmatprep.subr.mxu0 0.0
    %138 = vmatpush1.msra.mxu0 0.0
    %139 = vmatprep.subr.mxu0 0.0
    %140 = vmatpush1.msra.mxu0 0.0
    %141 = vmatprep.subr.mxu0 0.0
    %142 = vmatpush1.msra.mxu0 0.0
    %143 = vmatprep.subr.mxu0 0.0
    %144 = vmatpush1.msra.mxu0 0.0
    %145 = vmatprep.subr.mxu0 0.0
    %146 = vmatpush1.msra.mxu0 0.0
    %147 = vmatprep.subr.mxu0 0.0
    %148 = vmatpush1.msra.mxu0 %v39
    %149 = vmatprep.subr.mxu0 0.0
    %150 = vmatpush1.msra.mxu0 %v38
    %151 = vmatprep.subr.mxu0 0.0
    %152 = vmatpush2.msra.mxu0 0.0
    %153 = vmatprep.subr.mxu0 0.0
    %154 = vmatpush2.msra.mxu0 0.0
    %155 = vmatprep.subr.mxu0 0.0
    %156 = vmatpush2.msra.mxu0 0.0
    %157 = vmatprep.subr.mxu0 0.0
    %158 = vmatpush2.msra.mxu0 0.0
    %159 = vmatprep.subr.mxu0 0.0
    %160 = vmatpush2.msra.mxu0 0.0
    %161 = vmatprep.subr.mxu0 0.0
    %162 = vmatpush2.msra.mxu0 0.0
    %163 = vmatprep.subr.mxu0 0.0
    %164 = vmatpush2.msra.mxu0 0.0
    %165 = vmatprep.subr.mxu0 0.0
    %166 = vmatpush2.msra.mxu0 0.0
    %167 = vmatprep.subr.mxu0 0.0
    %168 = vmatpush2.msra.mxu0 0.0
    %169 = vmatprep.subr.mxu0 0.0
    %170 = vmatpush2.msra.mxu0 0.0
    %171 = vmatprep.subr.mxu0 0.0
    %172 = vmatpush2.msra.mxu0 0.0
    %173 = vmatprep.subr.mxu0 0.0
    %174 = vmatpush2.msra.mxu0 0.0
    %175 = vmatprep.subr.mxu0 0.0
    %176 = vmatpush2.msra.mxu0 0.0
    %177 = vmatprep.subr.mxu0 0.0
    %178 = vmatpush2.msra.mxu0 0.0
    %179 = vmatprep.subr.mxu0 0.0
    %180 = vmatpush2.msra.mxu0 0.0
    %181 = vmatprep.subr.mxu0 0.0
    %182 = vmatpush2.msra.mxu0 0.0
    %183 = vmatprep.mubr.f32.mxu0 0.0
    %184 = vmatmul.mubr.f32.gmra.mxu0 %v117
    %v185 = vpop.f32.mrf.mxu0
    %v186 = vadd.f32 %v112, %v185
    %v187 = vpop.f32.mrf.mxu0
    %188 = vdwg.mxu0
    %v189 = vld [vmem:[%s4] sm:$0x1]
    %v191 = vlaneseq
    %v192 = vshrl.u32 %v191, 7
    %v193 = vsub.s32 0, %v192
    %v194 = vrot.slane %v189, %v193
    %v196 = vadd.f32 %v186, %v194
    %vm197 = vcmp.gt.f32.partialorder %v196, 0.0
    %v198 = vmul.f32 %v196, 1.442695
    %v199 = vpow.pop %v198
    %v200 = vsub.f32 %v199, 1.0
    %v201 = vmul.f32 %v200, 1.6732632
    %v202 = vsel %vm197, %v196, %v201
    %v203 = vmul.f32 %v202, 1.050701
    %v204 = vld [vmem:[%s5] sm:$0xff]
    %v205 = vld [vmem:[%s5 + $0x8] sm:$0xff]
    %v206 = vld [vmem:[%s5 + $0x10] sm:$0xff]
    %v207 = vld [vmem:[%s5 + $0x18] sm:$0xff]
    %v208 = vld [vmem:[%s5 + $0x20] sm:$0xff]
    %v209 = vld [vmem:[%s5 + $0x28] sm:$0xff]
    %v210 = vld [vmem:[%s5 + $0x30] sm:$0xff]
    %v211 = vld [vmem:[%s5 + $0x38] sm:$0xff]
    %v212 = vld [vmem:[%s5 + $0x40] sm:$0xff]
    %v213 = vld [vmem:[%s5 + $0x48] sm:$0xff]
    %v214 = vld [vmem:[%s5 + $0x50] sm:$0xff]
    %v215 = vld [vmem:[%s5 + $0x58] sm:$0xff]
    %v216 = vld [vmem:[%s5 + $0x60] sm:$0xff]
    %v217 = vld [vmem:[%s5 + $0x68] sm:$0xff]
    %v218 = vld [vmem:[%s5 + $0x70] sm:$0xff]
    %v219 = vld [vmem:[%s5 + $0x78] sm:$0xff]
    %v220 = vld [vmem:[%s6] sm:$0x1]
    %v222 = vlaneseq
    %v223 = vshrl.u32 %v222, 7
    %v224 = vsub.s32 0, %v223
    %v225 = vrot.slane %v220, %v224
    %227 = vmatprep.subr.mxu0 0.0
    %228 = vmatpush1.msra.mxu0 %v219
    %229 = vmatprep.subr.mxu0 0.0
    %230 = vmatpush1.msra.mxu0 %v218
    %231 = vmatprep.subr.mxu0 0.0
    %232 = vmatpush1.msra.mxu0 %v217
    %233 = vmatprep.subr.mxu0 0.0
    %234 = vmatpush1.msra.mxu0 %v216
    %235 = vmatprep.subr.mxu0 0.0
    %236 = vmatpush1.msra.mxu0 %v215
    %237 = vmatprep.subr.mxu0 0.0
    %238 = vmatpush1.msra.mxu0 %v214
    %239 = vmatprep.subr.mxu0 0.0
    %240 = vmatpush1.msra.mxu0 %v213
    %241 = vmatprep.subr.mxu0 0.0
    %242 = vmatpush1.msra.mxu0 %v212
    %243 = vmatprep.subr.mxu0 0.0
    %244 = vmatpush1.msra.mxu0 %v211
    %245 = vmatprep.subr.mxu0 0.0
    %246 = vmatpush1.msra.mxu0 %v210
    %247 = vmatprep.subr.mxu0 0.0
    %248 = vmatpush1.msra.mxu0 %v209
    %249 = vmatprep.subr.mxu0 0.0
    %250 = vmatpush1.msra.mxu0 %v208
    %251 = vmatprep.subr.mxu0 0.0
    %252 = vmatpush1.msra.mxu0 %v207
    %253 = vmatprep.subr.mxu0 0.0
    %254 = vmatpush1.msra.mxu0 %v206
    %255 = vmatprep.subr.mxu0 0.0
    %256 = vmatpush1.msra.mxu0 %v205
    %257 = vmatprep.subr.mxu0 0.0
    %258 = vmatpush1.msra.mxu0 %v204
    %259 = vmatprep.subr.mxu0 0.0
    %260 = vmatpush2.msra.mxu0 0.0
    %261 = vmatprep.subr.mxu0 0.0
    %262 = vmatpush2.msra.mxu0 0.0
    %263 = vmatprep.subr.mxu0 0.0
    %264 = vmatpush2.msra.mxu0 0.0
    %265 = vmatprep.subr.mxu0 0.0
    %266 = vmatpush2.msra.mxu0 0.0
    %267 = vmatprep.subr.mxu0 0.0
    %268 = vmatpush2.msra.mxu0 0.0
    %269 = vmatprep.subr.mxu0 0.0
    %270 = vmatpush2.msra.mxu0 0.0
    %271 = vmatprep.subr.mxu0 0.0
    %272 = vmatpush2.msra.mxu0 0.0
    %273 = vmatprep.subr.mxu0 0.0
    %274 = vmatpush2.msra.mxu0 0.0
    %275 = vmatprep.subr.mxu0 0.0
    %276 = vmatpush2.msra.mxu0 0.0
    %277 = vmatprep.subr.mxu0 0.0
    %278 = vmatpush2.msra.mxu0 0.0
    %279 = vmatprep.subr.mxu0 0.0
    %280 = vmatpush2.msra.mxu0 0.0
    %281 = vmatprep.subr.mxu0 0.0
    %282 = vmatpush2.msra.mxu0 0.0
    %283 = vmatprep.subr.mxu0 0.0
    %284 = vmatpush2.msra.mxu0 0.0
    %285 = vmatprep.subr.mxu0 0.0
    %286 = vmatpush2.msra.mxu0 0.0
    %287 = vmatprep.subr.mxu0 0.0
    %288 = vmatpush2.msra.mxu0 0.0
    %289 = vmatprep.subr.mxu0 0.0
    %290 = vmatpush2.msra.mxu0 0.0
    %291 = vmatprep.mubr.f32.mxu0 0.0
    %292 = vmatmul.mubr.f32.gmra.mxu0 %v203
    %v293 = vpop.f32.mrf.mxu0
    %v294 = vadd.f32 %v225, %v293
    %v295 = vpop.f32.mrf.mxu0
    %296 = vdwg.mxu0
    %vm297 = vcmp.gt.f32.partialorder %v294, 0.0
    %v298 = vmul.f32 %v294, 1.442695
    %v299 = vpow.pop %v298
    %v300 = vsub.f32 %v299, 1.0
    %v301 = vmul.f32 %v300, 1.6732632
    %v302 = vsel %vm297, %v294, %v301
    %v303 = vmul.f32 %v302, 1.050701
    %v304 = vld [vmem:[%s7] sm:$0xff]
    %v305 = vld [vmem:[%s7 + $0x8] sm:$0xff]
    %v306 = vld [vmem:[%s7 + $0x10] sm:$0xff]
    %v307 = vld [vmem:[%s7 + $0x18] sm:$0xff]
    %v308 = vld [vmem:[%s7 + $0x20] sm:$0xff]
    %v309 = vld [vmem:[%s7 + $0x28] sm:$0xff]
    %v310 = vld [vmem:[%s7 + $0x30] sm:$0xff]
    %v311 = vld [vmem:[%s7 + $0x38] sm:$0xff]
    %v312 = vld [vmem:[%s7 + $0x40] sm:$0xff]
    %v313 = vld [vmem:[%s7 + $0x48] sm:$0xff]
    %v314 = vld [vmem:[%s7 + $0x50] sm:$0xff]
    %v315 = vld [vmem:[%s7 + $0x58] sm:$0xff]
    %v316 = vld [vmem:[%s7 + $0x60] sm:$0xff]
    %v317 = vld [vmem:[%s7 + $0x68] sm:$0xff]
    %v318 = vld [vmem:[%s7 + $0x70] sm:$0xff]
    %v319 = vld [vmem:[%s7 + $0x78] sm:$0xff]
    %v320 = vld [vmem:[%s8] sm:$0x1]
    %v322 = vlaneseq
    %v323 = vshrl.u32 %v322, 7
    %v324 = vsub.s32 0, %v323
    %v325 = vrot.slane %v320, %v324
    %327 = vmatprep.subr.mxu0 0.0
    %328 = vmatpush1.msra.mxu0 %v319
    %329 = vmatprep.subr.mxu0 0.0
    %330 = vmatpush1.msra.mxu0 %v318
    %331 = vmatprep.subr.mxu0 0.0
    %332 = vmatpush1.msra.mxu0 %v317
    %333 = vmatprep.subr.mxu0 0.0
    %334 = vmatpush1.msra.mxu0 %v316
    %335 = vmatprep.subr.mxu0 0.0
    %336 = vmatpush1.msra.mxu0 %v315
    %337 = vmatprep.subr.mxu0 0.0
    %338 = vmatpush1.msra.mxu0 %v314
    %339 = vmatprep.subr.mxu0 0.0
    %340 = vmatpush1.msra.mxu0 %v313
    %341 = vmatprep.subr.mxu0 0.0
    %342 = vmatpush1.msra.mxu0 %v312
    %343 = vmatprep.subr.mxu0 0.0
    %344 = vmatpush1.msra.mxu0 %v311
    %345 = vmatprep.subr.mxu0 0.0
    %346 = vmatpush1.msra.mxu0 %v310
    %347 = vmatprep.subr.mxu0 0.0
    %348 = vmatpush1.msra.mxu0 %v309
    %349 = vmatprep.subr.mxu0 0.0
    %350 = vmatpush1.msra.mxu0 %v308
    %351 = vmatprep.subr.mxu0 0.0
    %352 = vmatpush1.msra.mxu0 %v307
    %353 = vmatprep.subr.mxu0 0.0
    %354 = vmatpush1.msra.mxu0 %v306
    %355 = vmatprep.subr.mxu0 0.0
    %356 = vmatpush1.msra.mxu0 %v305
    %357 = vmatprep.subr.mxu0 0.0
    %358 = vmatpush1.msra.mxu0 %v304
    %359 = vmatprep.subr.mxu0 0.0
    %360 = vmatpush2.msra.mxu0 0.0
    %361 = vmatprep.subr.mxu0 0.0
    %362 = vmatpush2.msra.mxu0 0.0
    %363 = vmatprep.subr.mxu0 0.0
    %364 = vmatpush2.msra.mxu0 0.0
    %365 = vmatprep.subr.mxu0 0.0
    %366 = vmatpush2.msra.mxu0 0.0
    %367 = vmatprep.subr.mxu0 0.0
    %368 = vmatpush2.msra.mxu0 0.0
    %369 = vmatprep.subr.mxu0 0.0
    %370 = vmatpush2.msra.mxu0 0.0
    %371 = vmatprep.subr.mxu0 0.0
    %372 = vmatpush2.msra.mxu0 0.0
    %373 = vmatprep.subr.mxu0 0.0
    %374 = vmatpush2.msra.mxu0 0.0
    %375 = vmatprep.subr.mxu0 0.0
    %376 = vmatpush2.msra.mxu0 0.0
    %377 = vmatprep.subr.mxu0 0.0
    %378 = vmatpush2.msra.mxu0 0.0
    %379 = vmatprep.subr.mxu0 0.0
    %380 = vmatpush2.msra.mxu0 0.0
    %381 = vmatprep.subr.mxu0 0.0
    %382 = vmatpush2.msra.mxu0 0.0
    %383 = vmatprep.subr.mxu0 0.0
    %384 = vmatpush2.msra.mxu0 0.0
    %385 = vmatprep.subr.mxu0 0.0
    %386 = vmatpush2.msra.mxu0 0.0
    %387 = vmatprep.subr.mxu0 0.0
    %388 = vmatpush2.msra.mxu0 0.0
    %389 = vmatprep.subr.mxu0 0.0
    %390 = vmatpush2.msra.mxu0 0.0
    %391 = vmatprep.mubr.f32.mxu0 0.0
    %392 = vmatmul.mubr.f32.gmra.mxu0 %v303
    %v393 = vpop.f32.mrf.mxu0
    %v394 = vadd.f32 %v325, %v393
    %v395 = vpop.f32.mrf.mxu0
    %396 = vdwg.mxu0
    %vm397 = vcmask 261120
    %398 = vst.msk [vmem:[#allocation2] sm:$0xff] %vm397, %v394
    %400 = vrot.lane.b32.xlu0 %v394, 96
    %v401 = vpop.permute.xlu0 %400
    %403 = vst.msk [vmem:[#allocation4] sm:$0xff] %vm397, %v401
    // Predicated region
    $region38: #{tpu_custom_call.1} parent=1 // pred_check
      _
    $region39: #{tpu_custom_call.1} parent=1 // pred_check_branch
      %405 = sbr.rel (0) target = $region41
    $region40: #{tpu_custom_call.1} parent=1 // pred_region
      %s407 = ssub.s32 128, 128
      %408 = vsyncadd [#allocation3], %s407
      %s410 = sshll.u32 [#allocation2], 4
      %s411 = int_to_ptr.vmem [resolvable:$true] %s410
      %413 = dma.vmem_to_hbm [thread:$0]  %s411, 128, %s9, [#allocation3]
    $region41: #{tpu_custom_call.1} parent=1 // pred_fallthru
      _
    // Predicated region
    $region42: #{tpu_custom_call.1} parent=1 // pred_check
      _
    $region43: #{tpu_custom_call.1} parent=1 // pred_check_branch
      %415 = sbr.rel (0) target = $region45
    $region44: #{tpu_custom_call.1} parent=1 // pred_region
      %s417 = ssub.s32 128, 128
      %418 = vsyncadd [#allocation5], %s417
      %s420 = sshll.u32 [#allocation4], 4
      %s421 = int_to_ptr.vmem [resolvable:$true] %s420
      %423 = dma.vmem_to_hbm [thread:$0]  %s421, 128, %s10, [#allocation5]
    $region45: #{tpu_custom_call.1} parent=1 // pred_fallthru
      _
    // Predicated region
    $region46: #{tpu_custom_call.1} parent=1 // pred_check
      _
    $region47: #{tpu_custom_call.1} parent=1 // pred_check_branch
      %425 = sbr.rel (0) target = $region49
    $region48: #{tpu_custom_call.1} parent=1 // pred_region
      %426 = dma.done [#allocation3], 128
    $region49: #{tpu_custom_call.1} parent=1 // pred_fallthru
      _
    // Predicated region
    $region50: #{tpu_custom_call.1} parent=1 // pred_check
      _
    $region51: #{tpu_custom_call.1} parent=1 // pred_check_branch
      %428 = sbr.rel (0) target = $region53
    $region52: #{tpu_custom_call.1} parent=1 // pred_region
      %429 = dma.done [#allocation5], 128
    $region53: #{tpu_custom_call.1} parent=1 // pred_fallthru
      _
    %430 = vsyncpa [#allocation3], 1
    %431 = vsyncpa [#allocation5], 1

</llo_original>
